<compile_context>
chip_gen: v7x
topology: tpu7x:2x2x1
jax: 0.10.0
libtpu: 0.0.40
codegen_flags: <defaults>
</compile_context>

<pallas_src>
import jax
import jax.numpy as jnp
from jax.experimental import pallas as pl
from jax.experimental.pallas import tpu as pltpu


# ----------------------------------------------------------------------------- kernel

def pnn_kernel(x_ref, w1_ref, t1_ref, w2_ref, t2_ref, wf_ref, bf_ref, out_ref):
    x = x_ref[...]                                                     # (K, TB) bf16/f32

    # Layer 1 (product layer + first dense + BN1 folded): (H1, K) @ (K, TB)
    h = jnp.dot(w1_ref[...], x, preferred_element_type=jnp.float32) + t1_ref[...]
    h = jnp.maximum(h, 0.0).astype(w2_ref.dtype)                       # (H1, TB)

    # Layer 2 (dense + BN2 folded): (H2, H1) @ (H1, TB)
    h = jnp.dot(w2_ref[...], h, preferred_element_type=jnp.float32) + t2_ref[...]
    h = jnp.maximum(h, 0.0)                                            # (H2, TB) f32

    # Final fc (H2 -> 1): VPU multiply + sublane reduce -> lane-dense (1, TB) store.
    out_ref[...] = jnp.sum(h * wf_ref[...], axis=0, keepdims=True) + bf_ref[...]


# ----------------------------------------------------------------------- one-time prep

def prepare_pnn_params(params, num_field, embedding_size, eps=1e-5,
                       compute_dtype=jnp.bfloat16):
    """Hoisted, one-time weight prep: flatten, fold W1/BN into the product weights,
    transpose for the batch-on-lanes kernel layout, cast matmul operands to compute_dtype."""
    N, M = num_field, embedding_size
    NM, MM = N * M, M * M
    D = params["linear_weights"].shape[0]

    W1 = jnp.asarray(params["W1"], jnp.float32)
    lw_flat = jnp.transpose(params["linear_weights"], (1, 2, 0)).reshape(NM, D)     # (NM, D)
    qw_flat = jnp.transpose(params["quadratic_weights"], (1, 2, 0)).reshape(MM, D)  # (MM, D)
    Wcat = jnp.concatenate([lw_flat @ W1[:D], qw_flat @ W1[D:]], axis=0)            # (K, H1)

    # Fold eval-mode BatchNorm (+ linear biases) into the matmul weights / shifts.
    s1 = params["bn1_gamma"] / jnp.sqrt(params["bn1_var"] + eps)
    t1 = (params["b1"] - params["bn1_mean"]) * s1 + params["bn1_beta"]
    s2 = params["bn2_gamma"] / jnp.sqrt(params["bn2_var"] + eps)
    t2 = (params["b2"] - params["bn2_mean"]) * s2 + params["bn2_beta"]

    W1T = (Wcat * s1[None, :]).T                                       # (H1, K)
    W2T = (jnp.asarray(params["W2"], jnp.float32) * s2[None, :]).T     # (H2, H1)

    return dict(
        feat_embeddings=jnp.asarray(params["feat_embeddings"], jnp.float32),
        w1t=jnp.asarray(W1T, compute_dtype),
        t1=jnp.asarray(t1, jnp.float32)[:, None],                      # (H1, 1)
        w2t=jnp.asarray(W2T, compute_dtype),
        t2=jnp.asarray(t2, jnp.float32)[:, None],                      # (H2, 1)
        wf=jnp.asarray(params["Wf"], jnp.float32),                     # (H2, 1)
        bf=jnp.asarray(params["bf"], jnp.float32)[:, None],            # (1, 1)
    )


# ----------------------------------------------------------------------------- forward

def pnn_forward(prep, feat_index, feat_value, *, batch_tile=1024):
    # feat_value is accepted but unused -- matches the PyTorch forward.
    del feat_value
    emb = jnp.take(prep["feat_embeddings"], feat_index, axis=0)        # (B, N, M) f32
    B, N, M = emb.shape
    NM, MM = N * M, M * M
    K = NM + MM
    cdt = prep["w1t"].dtype

    # Wrapper glue (fused XLA VPU work on top of the gather): flatten emb, field-sum,
    # flattened outer product, K-concat, transpose to batch-on-lanes, cast to compute dtype.
    x_lin_T = jnp.transpose(emb, (1, 2, 0)).reshape(NM, B)             # (NM, B)
    es_T = jnp.sum(emb, axis=1).T                                      # (M, B)
    op_T = (es_T[:, None, :] * es_T[None, :, :]).reshape(MM, B)        # (MM, B)
    x_cat = jnp.concatenate([x_lin_T, op_T], axis=0).astype(cdt)       # (K, B)

    # Batch tile on the lane axis: full batch when small, otherwise a multiple of 128
    # chosen so there are >= 2 grid steps (v7x megacore). Pad so every block is in-bounds.
    if B < 256:
        TB, B_pad = B, B
    else:
        TB = max(128, min(int(batch_tile) // 128 * 128, (B // 2) // 128 * 128))
        B_pad = -(-B // TB) * TB
    if B_pad != B:
        x_cat = jnp.pad(x_cat, ((0, 0), (0, B_pad - B)))
    n_tiles = B_pad // TB

    weight_args = (prep["w1t"], prep["t1"], prep["w2t"], prep["t2"], prep["wf"], prep["bf"])
    H1, H2 = prep["w1t"].shape[0], prep["w2t"].shape[0]

    in_specs = ([pl.BlockSpec((K, TB), lambda i: (0, i))]              # streamed batch tile
                + [pl.BlockSpec(w.shape, lambda i: (0, 0))             # VMEM-resident weights
                   for w in weight_args])
    out_spec = pl.BlockSpec((1, TB), lambda i: (0, i))                 # lane-dense output row

    cost = pl.CostEstimate(
        flops=2 * int(B_pad) * (K * H1 + H1 * H2 + H2),
        transcendentals=0,
        bytes_accessed=(int(x_cat.size) * x_cat.dtype.itemsize
                        + sum(int(w.size) * w.dtype.itemsize for w in weight_args)
                        + 4 * int(B_pad)),
    )

    out = pl.pallas_call(
        pnn_kernel,
        out_shape=jax.ShapeDtypeStruct((1, B_pad), jnp.float32),
        grid=(n_tiles,),
        in_specs=in_specs,
        out_specs=out_spec,
        compiler_params=pltpu.CompilerParams(
            dimension_semantics=("parallel",)),        # v7x: shard batch tiles over 2 TCs
        cost_estimate=cost,
    )(x_cat, *weight_args)

    return out.reshape(B_pad, 1)[:B]


# ------------------------------------------------------------------------ init / reference

def xavier_uniform(key, shape, fan_in, fan_out):
    limit = (6.0 / (fan_in + fan_out)) ** 0.5
    return jax.random.uniform(key, shape, jnp.float32, -limit, limit)


def init_params(key, num_feat, num_field, embedding_size, product_layer_dim, deep_layer_sizes):
    D = product_layer_dim
    keys = jax.random.split(key, 8)
    p = {}
    p["feat_embeddings"] = xavier_uniform(keys[0], (num_feat, embedding_size),
                                          embedding_size, num_feat)
    p["linear_weights"] = xavier_uniform(keys[1], (D, num_field, embedding_size),
                                         num_field * embedding_size, D * embedding_size)
    p["quadratic_weights"] = xavier_uniform(keys[2], (D, embedding_size, embedding_size),
                                            embedding_size * embedding_size, D * embedding_size)
    all_dims = [2 * D] + list(deep_layer_sizes)
    kidx = 3
    for i in range(1, len(deep_layer_sizes) + 1):
        fi, fo = all_dims[i - 1], all_dims[i]
        p[f"W{i}"] = xavier_uniform(keys[kidx], (fi, fo), fi, fo); kidx += 1
        p[f"b{i}"] = jnp.zeros((fo,), jnp.float32)
        p[f"bn{i}_gamma"] = jnp.ones((fo,), jnp.float32)
        p[f"bn{i}_beta"] = jnp.zeros((fo,), jnp.float32)
        p[f"bn{i}_mean"] = jnp.zeros((fo,), jnp.float32)
        p[f"bn{i}_var"] = jnp.ones((fo,), jnp.float32)
    p["Wf"] = xavier_uniform(keys[kidx], (deep_layer_sizes[-1], 1), deep_layer_sizes[-1], 1)
    p["bf"] = jnp.zeros((1,), jnp.float32)
    return p


def pnn_reference(params, feat_index):
    """Plain-JAX f32 reference (same eval semantics) for correctness checking."""
    emb = jnp.take(params["feat_embeddings"], feat_index, axis=0)
    lz = jnp.einsum('bnm,dnm->bd', emb, params["linear_weights"])
    esum = emb.sum(axis=1)
    pmat = jnp.einsum('bi,bj->bij', esum, esum)
    lp = jnp.einsum('bij,dij->bd', pmat, params["quadratic_weights"])
    y = jnp.concatenate([lz, lp], axis=1)
    eps = 1e-5
    for i in (1, 2):
        y = y @ params[f"W{i}"] + params[f"b{i}"]
        s = params[f"bn{i}_gamma"] / jnp.sqrt(params[f"bn{i}_var"] + eps)
        y = (y - params[f"bn{i}_mean"]) * s + params[f"bn{i}_beta"]
        y = jnp.maximum(y, 0.0)
    return y @ params["Wf"] + params["bf"]


# ----------------------------------------------------------------------------------- main

if __name__ == "__main__":
    num_feat, num_field, embedding_size = 32, 8, 10
    product_layer_dim = 10
    deep_layer_sizes = [32, 32]

    key = jax.random.PRNGKey(0)
    pkey, ikey, vkey, ikey2 = jax.random.split(key, 4)
    params = init_params(pkey, num_feat, num_field, embedding_size,
                         product_layer_dim, deep_layer_sizes)

    # One-time prep: f32 path (exactness check) and bf16 path (fast production path).
    prep_f32 = prepare_pnn_params(params, num_field, embedding_size,
                                  compute_dtype=jnp.float32)
    prep_bf16 = prepare_pnn_params(params, num_field, embedding_size,
                                   compute_dtype=jnp.bfloat16)

    fwd = jax.jit(pnn_forward)

    # Test 1: tiny batch, f32 operands, tight tolerance vs the f32 reference.
    B = 8
    feat_index = jax.random.randint(ikey, (B, num_field), 0, num_feat)
    feat_value = jax.random.uniform(vkey, (B, num_field), jnp.float32)   # unused by forward
    out = jax.block_until_ready(fwd(prep_f32, feat_index, feat_value))
    ref = jax.block_until_ready(pnn_reference(params, feat_index))
    assert out.shape == (B, 1), out.shape
    assert jnp.allclose(out, ref, atol=1e-4, rtol=1e-4), (out, ref)

    # Test 2: same batch through the bf16 fast path (f32 accumulation), relaxed tolerance.
    out_bf = jax.block_until_ready(fwd(prep_bf16, feat_index, feat_value))
    assert out_bf.shape == (B, 1), out_bf.shape
    assert jnp.allclose(out_bf, ref, atol=2e-2, rtol=2e-2), (out_bf, ref)

    # Test 3: bf16 path with a real multi-step grid + batch padding (B=300 -> 3 tiles of 128).
    B2 = 300
    feat_index2 = jax.random.randint(ikey2, (B2, num_field), 0, num_feat)
    feat_value2 = jnp.ones((B2, num_field), jnp.float32)
    out2 = jax.block_until_ready(fwd(prep_bf16, feat_index2, feat_value2))
    ref2 = jax.block_until_ready(pnn_reference(params, feat_index2))
    assert out2.shape == (B2, 1), out2.shape
    assert jnp.allclose(out2, ref2, atol=2e-2, rtol=2e-2), (out2, ref2)

    print("KERNEL_OK")
</pallas_src>

<mosaic_0001>
module attributes {stable_mosaic.version = 11 : i64} {
  func.func @pnn_kernel(%arg0: i32, %arg1: memref<180x8xf32, #tpu.memory_space<vmem>>, %arg2: memref<32x180xf32, #tpu.memory_space<vmem>>, %arg3: memref<32x1xf32, #tpu.memory_space<vmem>>, %arg4: memref<32x32xf32, #tpu.memory_space<vmem>>, %arg5: memref<32x1xf32, #tpu.memory_space<vmem>>, %arg6: memref<32x1xf32, #tpu.memory_space<vmem>>, %arg7: memref<1x1xf32, #tpu.memory_space<vmem>>, %arg8: memref<1x8xf32, #tpu.memory_space<vmem>>) attributes {dimension_semantics = [#tpu.dimension_semantics<parallel>], iteration_bounds = array<i64: 1>, scalar_prefetch = 0 : i64, scratch_operands = 0 : i64, tpu.core_type = #tpu.core_type<tc>, window_params = [{transform_indices = @transform_0, window_bounds = array<i64: 180, 8>}, {pipeline_mode = #tpu.pipeline_mode<synchronous>, transform_indices = @transform_1, window_bounds = array<i64: 32, 180>}, {pipeline_mode = #tpu.pipeline_mode<synchronous>, transform_indices = @transform_2, window_bounds = array<i64: 32, 1>}, {pipeline_mode = #tpu.pipeline_mode<synchronous>, transform_indices = @transform_3, window_bounds = array<i64: 32, 32>}, {pipeline_mode = #tpu.pipeline_mode<synchronous>, transform_indices = @transform_4, window_bounds = array<i64: 32, 1>}, {pipeline_mode = #tpu.pipeline_mode<synchronous>, transform_indices = @transform_5, window_bounds = array<i64: 32, 1>}, {pipeline_mode = #tpu.pipeline_mode<synchronous>, transform_indices = @transform_6, window_bounds = array<i64: 1, 1>}, {transform_indices = @transform_7, window_bounds = array<i64: 1, 8>}]} {
    %c0 = arith.constant 0 : index
    %c0_0 = arith.constant 0 : index
    %0 = vector.load %arg1[%c0, %c0_0] : memref<180x8xf32, #tpu.memory_space<vmem>>, vector<180x8xf32>
    %c0_1 = arith.constant 0 : index
    %c0_2 = arith.constant 0 : index
    %1 = vector.load %arg2[%c0_1, %c0_2] : memref<32x180xf32, #tpu.memory_space<vmem>>, vector<32x180xf32>
    %cst = arith.constant dense<0.000000e+00> : vector<32x8xf32>
    %2 = tpu.matmul %1, %0, %cst {dimension_numbers = #tpu.dot_dimension_numbers<[1], [0], [0], [1], [0, 0, 1, 1], [], []>} : vector<32x180xf32>, vector<180x8xf32>, vector<32x8xf32> -> vector<32x8xf32>
    %c0_3 = arith.constant 0 : index
    %c0_4 = arith.constant 0 : index
    %3 = vector.load %arg3[%c0_3, %c0_4] : memref<32x1xf32, #tpu.memory_space<vmem>>, vector<32x1xf32>
    %4 = vector.broadcast %3 : vector<32x1xf32> to vector<32x8xf32>
    %5 = arith.addf %2, %4 : vector<32x8xf32>
    %cst_5 = arith.constant 0.000000e+00 : f32
    %6 = vector.broadcast %cst_5 : f32 to vector<32x8xf32>
    %7 = arith.maximumf %5, %6 : vector<32x8xf32>
    %c0_6 = arith.constant 0 : index
    %c0_7 = arith.constant 0 : index
    %8 = vector.load %arg4[%c0_6, %c0_7] : memref<32x32xf32, #tpu.memory_space<vmem>>, vector<32x32xf32>
    %cst_8 = arith.constant dense<0.000000e+00> : vector<32x8xf32>
    %9 = tpu.matmul %8, %7, %cst_8 {dimension_numbers = #tpu.dot_dimension_numbers<[1], [0], [0], [1], [0, 0, 1, 1], [], []>} : vector<32x32xf32>, vector<32x8xf32>, vector<32x8xf32> -> vector<32x8xf32>
    %c0_9 = arith.constant 0 : index
    %c0_10 = arith.constant 0 : index
    %10 = vector.load %arg5[%c0_9, %c0_10] : memref<32x1xf32, #tpu.memory_space<vmem>>, vector<32x1xf32>
    %11 = vector.broadcast %10 : vector<32x1xf32> to vector<32x8xf32>
    %12 = arith.addf %9, %11 : vector<32x8xf32>
    %cst_11 = arith.constant 0.000000e+00 : f32
    %13 = vector.broadcast %cst_11 : f32 to vector<32x8xf32>
    %14 = arith.maximumf %12, %13 : vector<32x8xf32>
    %c0_12 = arith.constant 0 : index
    %c0_13 = arith.constant 0 : index
    %15 = vector.load %arg6[%c0_12, %c0_13] : memref<32x1xf32, #tpu.memory_space<vmem>>, vector<32x1xf32>
    %16 = vector.broadcast %15 : vector<32x1xf32> to vector<32x8xf32>
    %17 = arith.mulf %14, %16 : vector<32x8xf32>
    %cst_14 = arith.constant dense<0.000000e+00> : vector<8xf32>
    %18 = vector.multi_reduction <add>, %17, %cst_14 [0] : vector<32x8xf32> to vector<8xf32>
    %19 = vector.shape_cast %18 : vector<8xf32> to vector<1x8xf32>
    %c0_15 = arith.constant 0 : index
    %c0_16 = arith.constant 0 : index
    %20 = vector.load %arg7[%c0_15, %c0_16] : memref<1x1xf32, #tpu.memory_space<vmem>>, vector<1x1xf32>
    %21 = vector.broadcast %20 : vector<1x1xf32> to vector<1x8xf32>
    %22 = arith.addf %19, %21 : vector<1x8xf32>
    %c0_17 = arith.constant 0 : index
    %c0_18 = arith.constant 0 : index
    %23 = vector.load %arg8[%c0_17, %c0_18] : memref<1x8xf32, #tpu.memory_space<vmem>>, vector<1x8xf32>
    tpu.vector_store %arg8[%c0_17, %c0_18], %22 {strides = array<i32>} : memref<1x8xf32, #tpu.memory_space<vmem>>, vector<1x8xf32>,
    return
  }
  func.func @transform_0(%arg0: i32) -> (i32, i32) {
    %c0_i32 = arith.constant 0 : i32
    %c0_i32_0 = arith.constant 0 : i32
    return %c0_i32, %arg0 : i32, i32
  }
  func.func @transform_1(%arg0: i32) -> (i32, i32) {
    %c0_i32 = arith.constant 0 : i32
    %c0_i32_0 = arith.constant 0 : i32
    %c0_i32_1 = arith.constant 0 : i32
    return %c0_i32, %c0_i32_0 : i32, i32
  }
  func.func @transform_2(%arg0: i32) -> (i32, i32) {
    %c0_i32 = arith.constant 0 : i32
    %c0_i32_0 = arith.constant 0 : i32
    %c0_i32_1 = arith.constant 0 : i32
    return %c0_i32, %c0_i32_0 : i32, i32
  }
  func.func @transform_3(%arg0: i32) -> (i32, i32) {
    %c0_i32 = arith.constant 0 : i32
    %c0_i32_0 = arith.constant 0 : i32
    %c0_i32_1 = arith.constant 0 : i32
    return %c0_i32, %c0_i32_0 : i32, i32
  }
  func.func @transform_4(%arg0: i32) -> (i32, i32) {
    %c0_i32 = arith.constant 0 : i32
    %c0_i32_0 = arith.constant 0 : i32
    %c0_i32_1 = arith.constant 0 : i32
    return %c0_i32, %c0_i32_0 : i32, i32
  }
  func.func @transform_5(%arg0: i32) -> (i32, i32) {
    %c0_i32 = arith.constant 0 : i32
    %c0_i32_0 = arith.constant 0 : i32
    %c0_i32_1 = arith.constant 0 : i32
    return %c0_i32, %c0_i32_0 : i32, i32
  }
  func.func @transform_6(%arg0: i32) -> (i32, i32) {
    %c0_i32 = arith.constant 0 : i32
    %c0_i32_0 = arith.constant 0 : i32
    %c0_i32_1 = arith.constant 0 : i32
    return %c0_i32, %c0_i32_0 : i32, i32
  }
  func.func @transform_7(%arg0: i32) -> (i32, i32) {
    %c0_i32 = arith.constant 0 : i32
    %c0_i32_0 = arith.constant 0 : i32
    return %c0_i32, %arg0 : i32, i32
  }
}

</mosaic_0001>

<llo_original>
// kernel: pnn_forward.1
$region0: #{pnn_forward.1}
  #allocation0 [shape = 'u32[]', space=smem, size = 0x4, offset = 0x4, fixed_abs, tag = 'smem constant byte address 0x4 - core index']
  #allocation1 [shape = 'u32[144,128]{1,0:T(1,128)}', space=vmem, size = 0x12000, scoped, tag = 'internal scratch']
  #allocation2 [shape = 'f32[1,1]{1,0:T(1,128)S(1)}', space=vmem, size = 0x200, scoped, tag = 'scoped memory for pnn_forward.1']
  %s0 = inlined_call_operand.vmem [shape: f32[180,8], index: 0, kind: input, shape index: {}]
  %s1 = inlined_call_operand.vmem [shape: f32[32,180], index: 1, kind: input, shape index: {}]
  %s2 = inlined_call_operand.vmem [shape: f32[32,1], index: 2, kind: input, shape index: {}]
  %s3 = inlined_call_operand.vmem [shape: f32[32,32], index: 3, kind: input, shape index: {}]
  %s4 = inlined_call_operand.vmem [shape: f32[32,1], index: 4, kind: input, shape index: {}]
  %s5 = inlined_call_operand.vmem [shape: f32[32,1], index: 5, kind: input, shape index: {}]
  %s6 = inlined_call_operand.<no memory space> [shape: f32[1,1], index: 6, kind: input, shape index: {}]
  %s7 = inlined_call_operand.hbm [shape: f32[1,8], index: 7, kind: output, shape index: {}]
  %s8 = sld [smem:[#allocation0]]
  $region38: #{pnn_forward.1} parent=0
    _
  %s10 = ssub.s32 1, %s8
  %s11 = scalar_select 0, %s10, %s8
  %v12 = vstv %s6
  %13 = vst [vmem:[#allocation2] sm:$0x1] %v12
  $region1: #{pnn_forward.1} parent=0
    #allocation3 [shape = 'u8[512]{0}', space=vmem, size = 0x400, scoped, tag = 'output window, operand 0, single buffered']
    #allocation4 [shape = 's32[1]{0}', space=sflag, size = 0x4, scoped, tag = 'scoped memory for pnn_forward.1']
    %14 = vsyncpa [#allocation4], 0
    // Predicated region
    $region2: #{pnn_forward.1} parent=1 // pred_check
      _
    $region3: #{pnn_forward.1} parent=1 // pred_check_branch
      %16 = sbr.rel (0) target = $region5
    $region4: #{pnn_forward.1} parent=1 // pred_region
      _
    $region5: #{pnn_forward.1} parent=1 // pred_fallthru
      _
    // Predicated region
    $region6: #{pnn_forward.1} parent=1 // pred_check
      _
    $region7: #{pnn_forward.1} parent=1 // pred_check_branch
      %18 = sbr.rel (0) target = $region9
    $region8: #{pnn_forward.1} parent=1 // pred_region
      _
    $region9: #{pnn_forward.1} parent=1 // pred_fallthru
      _
    // Predicated region
    $region10: #{pnn_forward.1} parent=1 // pred_check
      _
    $region11: #{pnn_forward.1} parent=1 // pred_check_branch
      %20 = sbr.rel (0) target = $region13
    $region12: #{pnn_forward.1} parent=1 // pred_region
      _
    $region13: #{pnn_forward.1} parent=1 // pred_fallthru
      _
    // Predicated region
    $region14: #{pnn_forward.1} parent=1 // pred_check
      _
    $region15: #{pnn_forward.1} parent=1 // pred_check_branch
      %22 = sbr.rel (0) target = $region17
    $region16: #{pnn_forward.1} parent=1 // pred_region
      _
    $region17: #{pnn_forward.1} parent=1 // pred_fallthru
      _
    // Predicated region
    $region18: #{pnn_forward.1} parent=1 // pred_check
      _
    $region19: #{pnn_forward.1} parent=1 // pred_check_branch
      %24 = sbr.rel (0) target = $region21
    $region20: #{pnn_forward.1} parent=1 // pred_region
      _
    $region21: #{pnn_forward.1} parent=1 // pred_fallthru
      _
    // Predicated region
    $region22: #{pnn_forward.1} parent=1 // pred_check
      _
    $region23: #{pnn_forward.1} parent=1 // pred_check_branch
      %26 = sbr.rel (0) target = $region25
    $region24: #{pnn_forward.1} parent=1 // pred_region
      _
    $region25: #{pnn_forward.1} parent=1 // pred_fallthru
      _
    // Predicated region
    $region26: #{pnn_forward.1} parent=1 // pred_check
      _
    $region27: #{pnn_forward.1} parent=1 // pred_check_branch
      %28 = sbr.rel (0) target = $region29
    $region28: #{pnn_forward.1} parent=1 // pred_region
      _
    $region29: #{pnn_forward.1} parent=1 // pred_fallthru
      _
    %v29 = vld [vmem:[%s0] sm:$0xff]
    %v30 = vld [vmem:[%s0 + $0x8] sm:$0xff]
    %v31 = vld [vmem:[%s0 + $0x10] sm:$0xff]
    %v32 = vld [vmem:[%s0 + $0x18] sm:$0xff]
    %v33 = vld [vmem:[%s0 + $0x20] sm:$0xff]
    %v34 = vld [vmem:[%s0 + $0x28] sm:$0xff]
    %v35 = vld [vmem:[%s0 + $0x30] sm:$0xff]
    %v36 = vld [vmem:[%s0 + $0x38] sm:$0xff]
    %v37 = vld [vmem:[%s0 + $0x40] sm:$0xff]
    %v38 = vld [vmem:[%s0 + $0x48] sm:$0xff]
    %v39 = vld [vmem:[%s0 + $0x50] sm:$0xff]
    %v40 = vld [vmem:[%s0 + $0x58] sm:$0xff]
    %v41 = vld [vmem:[%s0 + $0x60] sm:$0xff]
    %v42 = vld [vmem:[%s0 + $0x68] sm:$0xff]
    %v43 = vld [vmem:[%s0 + $0x70] sm:$0xff]
    %v44 = vld [vmem:[%s0 + $0x78] sm:$0xff]
    %v45 = vld [vmem:[%s0 + $0x80] sm:$0xff]
    %v46 = vld [vmem:[%s0 + $0x88] sm:$0xff]
    %v47 = vld [vmem:[%s0 + $0x90] sm:$0xff]
    %v48 = vld [vmem:[%s0 + $0x98] sm:$0xff]
    %v49 = vld [vmem:[%s0 + $0xa0] sm:$0xff]
    %v50 = vld [vmem:[%s0 + $0xa8] sm:$0xff]
    %v51 = vld [vmem:[%s0 + $0xb0] sm:$0xf]
    %v52 = vld [vmem:[%s1] sm:$0xff]
    %v53 = vld [vmem:[%s1 + $0x8] sm:$0xff]
    %v54 = vld [vmem:[%s1 + $0x10] sm:$0xff]
    %v55 = vld [vmem:[%s1 + $0x18] sm:$0xff]
    %v56 = vld [vmem:[%s1 + $0x20] sm:$0xff]
    %v57 = vld [vmem:[%s1 + $0x28] sm:$0xff]
    %v58 = vld [vmem:[%s1 + $0x30] sm:$0xff]
    %v59 = vld [vmem:[%s1 + $0x38] sm:$0xff]
    %v60 = vld [vmem:[%s2] sm:$0xff]
    %v61 = vld [vmem:[%s2 + $0x8] sm:$0xff]
    %v62 = vld [vmem:[%s2 + $0x10] sm:$0xff]
    %v63 = vld [vmem:[%s2 + $0x18] sm:$0xff]
    %65 = vset.pattern.permute.xlu0 0
    %66 = vperm.xlu0 %65, %v60
    %v67 = vpop.permute.xlu0 %66
    %70 = vset.pattern.permute.xlu0 0
    %71 = vperm.xlu0 %70, %v61
    %v72 = vpop.permute.xlu0 %71
    %75 = vset.pattern.permute.xlu0 0
    %76 = vperm.xlu0 %75, %v62
    %v77 = vpop.permute.xlu0 %76
    %80 = vset.pattern.permute.xlu0 0
    %81 = vperm.xlu0 %80, %v63
    %v82 = vpop.permute.xlu0 %81
    %vm84 = vcmask 424960
    %v86 = vsel %vm84, %v53, 0
    %v89 = vsel %vm84, %v55, 0
    %v92 = vsel %vm84, %v57, 0
    %v95 = vsel %vm84, %v59, 0
    %vm97 = vcmask 1043456
    %v99 = vsel %vm97, %v51, 0
    %101 = vmatprep.subr.mxu0 0.0
    %102 = vmatpush1.msra.mxu0 %v29
    %103 = vmatprep.subr.mxu0 0.0
    %104 = vmatpush1.msra.mxu0 %v30
    %105 = vmatprep.subr.mxu0 0.0
    %106 = vmatpush1.msra.mxu0 %v31
    %107 = vmatprep.subr.mxu0 0.0
    %108 = vmatpush1.msra.mxu0 %v32
    %109 = vmatprep.subr.mxu0 0.0
    %110 = vmatpush1.msra.mxu0 %v33
    %111 = vmatprep.subr.mxu0 0.0
    %112 = vmatpush1.msra.mxu0 %v34
    %113 = vmatprep.subr.mxu0 0.0
    %114 = vmatpush1.msra.mxu0 %v35
    %115 = vmatprep.subr.mxu0 0.0
    %116 = vmatpush1.msra.mxu0 %v36
    %117 = vmatprep.subr.mxu0 0.0
    %118 = vmatpush1.msra.mxu0 %v37
    %119 = vmatprep.subr.mxu0 0.0
    %120 = vmatpush1.msra.mxu0 %v38
    %121 = vmatprep.subr.mxu0 0.0
    %122 = vmatpush1.msra.mxu0 %v39
    %123 = vmatprep.subr.mxu0 0.0
    %124 = vmatpush1.msra.mxu0 %v40
    %125 = vmatprep.subr.mxu0 0.0
    %126 = vmatpush1.msra.mxu0 %v41
    %127 = vmatprep.subr.mxu0 0.0
    %128 = vmatpush1.msra.mxu0 %v42
    %129 = vmatprep.subr.mxu0 0.0
    %130 = vmatpush1.msra.mxu0 %v43
    %131 = vmatprep.subr.mxu0 0.0
    %132 = vmatpush1.msra.mxu0 %v44
    %133 = vmatprep.subr.mxu0 0.0
    %134 = vmatpush1.msra.mxu0 %v45
    %135 = vmatprep.subr.mxu0 0.0
    %136 = vmatpush1.msra.mxu0 %v46
    %137 = vmatprep.subr.mxu0 0.0
    %138 = vmatpush1.msra.mxu0 %v47
    %139 = vmatprep.subr.mxu0 0.0
    %140 = vmatpush1.msra.mxu0 %v48
    %141 = vmatprep.subr.mxu0 0.0
    %142 = vmatpush1.msra.mxu0 %v49
    %143 = vmatprep.subr.mxu0 0.0
    %144 = vmatpush1.msra.mxu0 %v50
    %145 = vmatprep.subr.mxu0 0.0
    %146 = vmatpush1.msra.mxu0 %v99
    %147 = vmatprep.subr.mxu0 0.0
    %148 = vmatpush1.msra.mxu0 0.0
    %149 = vmatprep.subr.mxu0 0.0
    %150 = vmatpush1.msra.mxu0 0.0
    %151 = vmatprep.subr.mxu0 0.0
    %152 = vmatpush1.msra.mxu0 0.0
    %153 = vmatprep.subr.mxu0 0.0
    %154 = vmatpush1.msra.mxu0 0.0
    %155 = vmatprep.subr.mxu0 0.0
    %156 = vmatpush1.msra.mxu0 0.0
    %157 = vmatprep.subr.mxu0 0.0
    %158 = vmatpush1.msra.mxu0 0.0
    %159 = vmatprep.subr.mxu0 0.0
    %160 = vmatpush1.msra.mxu0 0.0
    %161 = vmatprep.subr.mxu0 0.0
    %162 = vmatpush1.msra.mxu0 0.0
    %163 = vmatprep.subr.mxu0 0.0
    %164 = vmatpush1.msra.mxu0 0.0
    %165 = vmatprep.mubr.f32.mxu0 %v86
    %166 = vmatmul.mubr.f32.gmra.mrb[0].mxu0 %v52
    %v167 = vpop.f32.mrb[0].mxu0
    %v168 = vadd.f32 %v67, %v167
    %v169 = vpop.f32.mrb[0].mxu0
    %170 = vmatprep.mubr.f32.mxu0 %v89
    %171 = vmatmul.mubr.f32.gmra.mrb[0].mxu0 %v54
    %v172 = vpop.f32.mrb[0].mxu0
    %v173 = vadd.f32 %v72, %v172
    %v174 = vpop.f32.mrb[0].mxu0
    %175 = vmatprep.mubr.f32.mxu0 %v92
    %176 = vmatmul.mubr.f32.gmra.mrb[0].mxu0 %v56
    %v177 = vpop.f32.mrb[0].mxu0
    %v178 = vadd.f32 %v77, %v177
    %v179 = vpop.f32.mrb[0].mxu0
    %180 = vmatprep.mubr.f32.mxu0 %v95
    %181 = vmatmul.mubr.f32.gmra.mrb[0].mxu0 %v58
    %v182 = vpop.f32.mrb[0].mxu0
    %v183 = vadd.f32 %v82, %v182
    %v184 = vpop.f32.mrb[0].mxu0
    %185 = vdwg.mxu0
    %v186 = vmax.f32 %v168, 0.0
    %v187 = vmax.f32 %v173, 0.0
    %v188 = vmax.f32 %v178, 0.0
    %v189 = vmax.f32 %v183, 0.0
    %v190 = vld [vmem:[%s3] sm:$0xff]
    %v191 = vld [vmem:[%s3 + $0x8] sm:$0xff]
    %v192 = vld [vmem:[%s3 + $0x10] sm:$0xff]
    %v193 = vld [vmem:[%s3 + $0x18] sm:$0xff]
    %v194 = vld [vmem:[%s4] sm:$0xff]
    %v195 = vld [vmem:[%s4 + $0x8] sm:$0xff]
    %v196 = vld [vmem:[%s4 + $0x10] sm:$0xff]
    %v197 = vld [vmem:[%s4 + $0x18] sm:$0xff]
    %199 = vset.pattern.permute.xlu0 0
    %200 = vperm.xlu0 %199, %v194
    %v201 = vpop.permute.xlu0 %200
    %204 = vset.pattern.permute.xlu0 0
    %205 = vperm.xlu0 %204, %v195
    %v206 = vpop.permute.xlu0 %205
    %209 = vset.pattern.permute.xlu0 0
    %210 = vperm.xlu0 %209, %v196
    %v211 = vpop.permute.xlu0 %210
    %214 = vset.pattern.permute.xlu0 0
    %215 = vperm.xlu0 %214, %v197
    %v216 = vpop.permute.xlu0 %215
    %vm218 = vcmask 261120
    %v220 = vsel %vm218, %v190, 0
    %v223 = vsel %vm218, %v191, 0
    %v226 = vsel %vm218, %v192, 0
    %v229 = vsel %vm218, %v193, 0
    %231 = vmatprep.subr.mxu0 0.0
    %232 = vmatpush1.msra.mxu0 %v186
    %233 = vmatprep.subr.mxu0 0.0
    %234 = vmatpush1.msra.mxu0 %v187
    %235 = vmatprep.subr.mxu0 0.0
    %236 = vmatpush1.msra.mxu0 %v188
    %237 = vmatprep.subr.mxu0 0.0
    %238 = vmatpush1.msra.mxu0 %v189
    %239 = vmatprep.subr.mxu0 0.0
    %240 = vmatpush1.msra.mxu0 0.0
    %241 = vmatprep.subr.mxu0 0.0
    %242 = vmatpush1.msra.mxu0 0.0
    %243 = vmatprep.subr.mxu0 0.0
    %244 = vmatpush1.msra.mxu0 0.0
    %245 = vmatprep.subr.mxu0 0.0
    %246 = vmatpush1.msra.mxu0 0.0
    %247 = vmatprep.subr.mxu0 0.0
    %248 = vmatpush1.msra.mxu0 0.0
    %249 = vmatprep.subr.mxu0 0.0
    %250 = vmatpush1.msra.mxu0 0.0
    %251 = vmatprep.subr.mxu0 0.0
    %252 = vmatpush1.msra.mxu0 0.0
    %253 = vmatprep.subr.mxu0 0.0
    %254 = vmatpush1.msra.mxu0 0.0
    %255 = vmatprep.subr.mxu0 0.0
    %256 = vmatpush1.msra.mxu0 0.0
    %257 = vmatprep.subr.mxu0 0.0
    %258 = vmatpush1.msra.mxu0 0.0
    %259 = vmatprep.subr.mxu0 0.0
    %260 = vmatpush1.msra.mxu0 0.0
    %261 = vmatprep.subr.mxu0 0.0
    %262 = vmatpush1.msra.mxu0 0.0
    %263 = vmatprep.subr.mxu0 0.0
    %264 = vmatpush1.msra.mxu0 0.0
    %265 = vmatprep.subr.mxu0 0.0
    %266 = vmatpush1.msra.mxu0 0.0
    %267 = vmatprep.subr.mxu0 0.0
    %268 = vmatpush1.msra.mxu0 0.0
    %269 = vmatprep.subr.mxu0 0.0
    %270 = vmatpush1.msra.mxu0 0.0
    %271 = vmatprep.subr.mxu0 0.0
    %272 = vmatpush1.msra.mxu0 0.0
    %273 = vmatprep.subr.mxu0 0.0
    %274 = vmatpush1.msra.mxu0 0.0
    %275 = vmatprep.subr.mxu0 0.0
    %276 = vmatpush1.msra.mxu0 0.0
    %277 = vmatprep.subr.mxu0 0.0
    %278 = vmatpush1.msra.mxu0 0.0
    %279 = vmatprep.subr.mxu0 0.0
    %280 = vmatpush1.msra.mxu0 0.0
    %281 = vmatprep.subr.mxu0 0.0
    %282 = vmatpush1.msra.mxu0 0.0
    %283 = vmatprep.subr.mxu0 0.0
    %284 = vmatpush1.msra.mxu0 0.0
    %285 = vmatprep.subr.mxu0 0.0
    %286 = vmatpush1.msra.mxu0 0.0
    %287 = vmatprep.subr.mxu0 0.0
    %288 = vmatpush1.msra.mxu0 0.0
    %289 = vmatprep.subr.mxu0 0.0
    %290 = vmatpush1.msra.mxu0 0.0
    %291 = vmatprep.subr.mxu0 0.0
    %292 = vmatpush1.msra.mxu0 0.0
    %293 = vmatprep.subr.mxu0 0.0
    %294 = vmatpush1.msra.mxu0 0.0
    %295 = vmatprep.mubr.f32.mxu0 0.0
    %296 = vmatmul.mubr.f32.gmra.mrb[0].mxu0 %v220
    %v297 = vpop.f32.mrb[0].mxu0
    %v298 = vadd.f32 %v201, %v297
    %v299 = vpop.f32.mrb[0].mxu0
    %300 = vmatprep.mubr.f32.mxu0 0.0
    %301 = vmatmul.mubr.f32.gmra.mrb[0].mxu0 %v223
    %v302 = vpop.f32.mrb[0].mxu0
    %v303 = vadd.f32 %v206, %v302
    %v304 = vpop.f32.mrb[0].mxu0
    %305 = vmatprep.mubr.f32.mxu0 0.0
    %306 = vmatmul.mubr.f32.gmra.mrb[0].mxu0 %v226
    %v307 = vpop.f32.mrb[0].mxu0
    %v308 = vadd.f32 %v211, %v307
    %v309 = vpop.f32.mrb[0].mxu0
    %310 = vmatprep.mubr.f32.mxu0 0.0
    %311 = vmatmul.mubr.f32.gmra.mrb[0].mxu0 %v229
    %v312 = vpop.f32.mrb[0].mxu0
    %v313 = vadd.f32 %v216, %v312
    %v314 = vpop.f32.mrb[0].mxu0
    %315 = vdwg.mxu0
    %v316 = vmax.f32 %v298, 0.0
    %v317 = vmax.f32 %v303, 0.0
    %v318 = vmax.f32 %v308, 0.0
    %v319 = vmax.f32 %v313, 0.0
    %v320 = vld [vmem:[%s5] sm:$0xff]
    %v321 = vld [vmem:[%s5 + $0x8] sm:$0xff]
    %v322 = vld [vmem:[%s5 + $0x10] sm:$0xff]
    %v323 = vld [vmem:[%s5 + $0x18] sm:$0xff]
    %325 = vset.pattern.permute.xlu0 0
    %326 = vperm.xlu0 %325, %v320
    %v327 = vpop.permute.xlu0 %326
    %330 = vset.pattern.permute.xlu0 0
    %331 = vperm.xlu0 %330, %v321
    %v332 = vpop.permute.xlu0 %331
    %335 = vset.pattern.permute.xlu0 0
    %336 = vperm.xlu0 %335, %v322
    %v337 = vpop.permute.xlu0 %336
    %340 = vset.pattern.permute.xlu0 0
    %341 = vperm.xlu0 %340, %v323
    %v342 = vpop.permute.xlu0 %341
    %v344 = vmul.f32 %v316, %v327
    %v345 = vmul.f32 %v317, %v332
    %v346 = vmul.f32 %v318, %v337
    %v347 = vmul.f32 %v319, %v342
    %vm348 = vcmask 64512
    %v349 = vsel %vm348, %v344, 0.0
    %v350 = vsel %vm348, %v345, 0.0
    %v351 = vadd.f32 %v349, %v350
    %v352 = vsel %vm348, %v346, 0.0
    %v353 = vadd.f32 %v351, %v352
    %v354 = vsel %vm348, %v347, 0.0
    %v355 = vadd.f32 %v353, %v354
    %v356 = vrot.slane %v355, 4
    %v357 = vadd.f32 %v355, %v356
    %v358 = vrot.slane %v357, 2
    %v359 = vadd.f32 %v357, %v358
    %v360 = vrot.slane %v359, 1
    %v361 = vadd.f32 %v359, %v360
    %v362 = vld [vmem:[#allocation2] sm:$0x1]
    %364 = vset.pattern.permute.xlu0 0
    %365 = vperm.xlu0 %364, %v362
    %v366 = vpop.permute.xlu0 %365
    %v368 = vlaneseq
    %v369 = vshrl.u32 %v368, 7
    %v370 = vsub.s32 0, %v369
    %v371 = vrot.slane %v366, %v370
    %v372 = vadd.f32 %v361, %v371
    %vm373 = vcmask 57344
    %374 = vst.msk [vmem:[#allocation3] sm:$0x1] %vm373, %v372
    // Predicated region
    $region30: #{pnn_forward.1} parent=1 // pred_check
      _
    $region31: #{pnn_forward.1} parent=1 // pred_check_branch
      %376 = sbr.rel (0) target = $region33
    $region32: #{pnn_forward.1} parent=1 // pred_region
      %s378 = ssub.s32 16, 16
      %379 = vsyncadd [#allocation4], %s378
      %s381 = sshll.u32 [#allocation3], 4
      %s382 = int_to_ptr.vmem [resolvable:$true] %s381
      %384 = dma.vmem_to_hbm [thread:$0]  %s382, 16, %s7, [#allocation4]
    $region33: #{pnn_forward.1} parent=1 // pred_fallthru
      _
    // Predicated region
    $region34: #{pnn_forward.1} parent=1 // pred_check
      _
    $region35: #{pnn_forward.1} parent=1 // pred_check_branch
      %386 = sbr.rel (0) target = $region37
    $region36: #{pnn_forward.1} parent=1 // pred_region
      %387 = dma.done [#allocation4], 16
    $region37: #{pnn_forward.1} parent=1 // pred_fallthru
      _
    %388 = vsyncpa [#allocation4], 1

</llo_original>
